<compile_context>
chip_gen: v7x
topology: tpu7x:2x2x1
jax: 0.10.0
libtpu: 0.0.40
codegen_flags: <defaults>
</compile_context>

<pallas_src>
import functools

import jax
import jax.numpy as jnp
from jax import lax
from jax.experimental import pallas as pl
from jax.experimental.pallas import tpu as pltpu


def _round_up(x, m):
    return (x + m - 1) // m * m


def _tpu_vmem_capacity_bytes():
    """Physical per-core VMEM; conservative fallback if the query is unavailable."""
    try:
        return int(pltpu.get_tpu_info().vmem_capacity_bytes)
    except Exception:
        return 64 << 20   # v7x-class per-TC VMEM (safe lower bound)


# ---------------------------------------------------------------------------
# Kernel bodies
# ---------------------------------------------------------------------------
def _embed_onehot_kernel(ids_ref, table_ref, out_ref):
    """Small-vocab path: one-hot x table on the MXU.

    ids_ref   : VMEM (tile_t, 1) int32   (masked ids already remapped to the zero row)
    table_ref : VMEM (Vp, Dp)            whole table, single-buffered
    out_ref   : VMEM (tile_t, Dp)
    """
    ids = ids_ref[...]                                    # (tile_t, 1)
    tile_t = ids.shape[0]
    vp = table_ref.shape[0]
    cols = lax.broadcasted_iota(jnp.int32, (tile_t, vp), 1)
    onehot = (cols == ids).astype(table_ref.dtype)        # exact 0/1 selection
    out_ref[...] = jnp.dot(onehot, table_ref[...],
                           preferred_element_type=jnp.float32).astype(out_ref.dtype)


def _embed_gather_kernel(ids_ref, table_ref, out_ref, *, tile_t):
    """VMEM-resident-table gather; 8 rows per iteration, one aligned (8, Dp) store.

    ids_ref   : SMEM (T_pad,) int32   scalar-prefetched flattened (remapped) token ids
    table_ref : VMEM (Vp, Dp)         whole table, single-buffered
    out_ref   : VMEM (tile_t, Dp)
    """
    base = pl.program_id(0) * tile_t

    def body(g, carry):
        t0 = pl.multiple_of(g * 8, 8)
        # 8 independent dynamic-row loads -> the scheduler can pipeline the vld slots.
        rows = [table_ref[pl.ds(ids_ref[base + t0 + u], 1), :] for u in range(8)]
        # Single sublane-aligned dense (8, Dp) store (no masked single-row stores).
        out_ref[pl.ds(t0, 8), :] = jnp.concatenate(rows, axis=0)
        return carry

    lax.fori_loop(0, tile_t // 8, body, 0)


def _embed_stream_kernel(ids_ref, table_hbm, out_ref, sem_ref, *, tile_t, prefetch):
    """Streaming HBM row-gather: DMA each row straight into the output block.

    table_hbm : ANY/HBM (Vp, Dp)      raw HBM ref (no auto-DMA)
    out_ref   : VMEM (tile_t, Dp)     DMA destination (no staging buffer)
    sem_ref   : DMA semaphores, shape (prefetch,)
    """
    base = pl.program_id(0) * tile_t

    def start_row(t, rid):
        pltpu.make_async_copy(
            table_hbm.at[pl.ds(rid, 1), :],
            out_ref.at[pl.ds(t, 1), :],
            sem_ref.at[t % prefetch],
        ).start()

    def prime(t, carry):
        start_row(t, ids_ref[base + t])
        return carry

    # Keep `prefetch` row gathers in flight.
    lax.fori_loop(0, min(prefetch, tile_t), prime, 0)

    def body(t, carry):
        nxt = t + prefetch
        # Hoist the SMEM scalar read ABOVE the wait (.wait() breaks sst->sld forwarding).
        rid_next = ids_ref[base + jnp.minimum(nxt, tile_t - 1)]
        # Wait for row t (dummy src slice: byte count matches the started copy).
        pltpu.make_async_copy(
            table_hbm.at[pl.ds(0, 1), :],
            out_ref.at[pl.ds(t, 1), :],
            sem_ref.at[t % prefetch],
        ).wait()

        @pl.when(nxt < tile_t)
        def _():
            start_row(nxt, rid_next)

        return carry

    lax.fori_loop(0, tile_t, body, 0)


# ---------------------------------------------------------------------------
# Host-side helpers
# ---------------------------------------------------------------------------
def prepare_table(table, *, onehot_vocab_max=2048):
    """Pad the table (ideally once, at module init):
      - lane-pad D to a multiple of 128 (skipped when already aligned),
      - append an all-zero row at index V (mask/pad tokens are remapped there),
      - sublane-pad the vocab axis (to 128 for small vocabs so the one-hot MXU
        path gets clean tiles, otherwise to 8).
    """
    V, D = table.shape
    Dp = D if D % 128 == 0 else _round_up(D, 128)
    rows = V + 1
    Vp = _round_up(rows, 128) if rows <= onehot_vocab_max else _round_up(rows, 8)
    table_p = jnp.zeros((Vp, Dp), table.dtype).at[:V, :D].set(table)
    return table_p, V, D


def embedding_forward(x_ids, table, dropout=False, maskable=True, *,
                      mode="auto", tile_tokens=None, prefetch=None,
                      onehot_vocab_max=2048):
    """Pallas TPU version of Embedding.forward.

    x_ids : (B, S) integer token ids
    table : (V, D) float embedding table
    returns (B, S, D)
    """
    if dropout:
        # TODO(synk): training-mode nn.Dropout(0.1) (dropout=True) not implemented.
        raise NotImplementedError("dropout=True is not supported by this Pallas kernel")

    B, S = x_ids.shape
    # NOTE: in production, call prepare_table() once at module init; under jit with a
    # static table this constant-folds, so doing it here is fine for the demo.
    table_p, V, D = prepare_table(table, onehot_vocab_max=onehot_vocab_max)
    Vp, Dp = table_p.shape
    dtype = table_p.dtype
    esize = jnp.dtype(dtype).itemsize
    zero_row = V                      # index of the appended all-zero row

    # ---- per-chip budgets --------------------------------------------------
    phys_vmem = _tpu_vmem_capacity_bytes()
    small_vmem = phys_vmem <= (64 << 20)                    # v7x-class per-TC VMEM
    vmem_limit = min(int(phys_vmem * 0.78), 112 << 20)      # ~50 MiB v7x, ~100 MiB v5e/v6e

    # ---- token tiling --------------------------------------------------------
    T = B * S
    if tile_tokens is None:
        target = (2 << 20) if small_vmem else (4 << 20)     # out-block bytes per buffer
        tile_tokens = max(64, min(1024, target // max(Dp * esize, 1)))
    tile_t = _round_up(min(int(tile_tokens), _round_up(T, 8)), 8)
    T_pad = _round_up(T, tile_t)
    num_tiles = T_pad // tile_t

    # ---- id remapping: fold the padding mask into the zero table row --------
    # Clamp untrusted ids first (PyTorch would error on OOB ids; we redirect).
    ids = jnp.clip(x_ids.reshape(T).astype(jnp.int32), 0, V - 1)
    if maskable:
        # keep iff first position of its sequence (remolded_x[:, 0] = 1) OR id != 0
        first_pos = (jnp.arange(T, dtype=jnp.int32) % S) == 0
        keep = jnp.logical_or(first_pos, x_ids.reshape(T) != 0)
        ids = jnp.where(keep, ids, zero_row)
    if T_pad != T:
        ids = jnp.pad(ids, (0, T_pad - T), constant_values=zero_row)

    # ---- path selection -------------------------------------------------------
    table_bytes = Vp * Dp * esize           # single-buffered resident copy
    out_bytes = 2 * tile_t * Dp * esize     # double-buffered output blocks
    fits_resident = table_bytes + out_bytes + (4 << 20) <= vmem_limit
    if mode == "auto":
        if fits_resident and Vp <= onehot_vocab_max:
            mode = "onehot"
        elif fits_resident:
            mode = "resident"
        else:
            mode = "streaming"
    if mode not in ("onehot", "resident", "streaming"):
        raise ValueError(f"unknown mode: {mode}")

    cost = pl.CostEstimate(
        flops=(2 * T_pad * Vp * Dp) if mode == "onehot" else 0,
        transcendentals=0,
        bytes_accessed=int(2 * T_pad * Dp * esize + T_pad * 4 + table_bytes),
    )
    out_shape = jax.ShapeDtypeStruct((T_pad, Dp), dtype)
    compiler_params = pltpu.CompilerParams(
        dimension_semantics=("parallel",),     # independent token tiles (2 TCs on v7x)
        vmem_limit_bytes=int(vmem_limit),
    )

    if mode == "onehot":
        grid_spec = pltpu.PrefetchScalarGridSpec(
            num_scalar_prefetch=0,
            grid=(num_tiles,),
            in_specs=[
                pl.BlockSpec((tile_t, 1), lambda i: (i, 0)),          # ids column
                pl.BlockSpec(memory_space=pltpu.MemorySpace.VMEM),    # resident table
            ],
            out_specs=pl.BlockSpec((tile_t, Dp), lambda i: (i, 0)),
        )
        out_flat = pl.pallas_call(
            _embed_onehot_kernel, out_shape=out_shape, grid_spec=grid_spec,
            compiler_params=compiler_params, cost_estimate=cost,
        )(ids.reshape(T_pad, 1), table_p)

    elif mode == "resident":
        kernel = functools.partial(_embed_gather_kernel, tile_t=tile_t)
        grid_spec = pltpu.PrefetchScalarGridSpec(
            num_scalar_prefetch=1,
            grid=(num_tiles,),
            in_specs=[
                pl.BlockSpec(memory_space=pltpu.MemorySpace.VMEM),    # resident table
            ],
            out_specs=pl.BlockSpec((tile_t, Dp), lambda i, ids_sref: (i, 0)),
        )
        out_flat = pl.pallas_call(
            kernel, out_shape=out_shape, grid_spec=grid_spec,
            compiler_params=compiler_params, cost_estimate=cost,
        )(ids, table_p)

    else:  # streaming
        if prefetch is None:
            prefetch = 32 if small_vmem else 16   # deeper in-flight window on v7x HBM
        prefetch = int(max(1, min(prefetch, tile_t)))
        kernel = functools.partial(_embed_stream_kernel, tile_t=tile_t,
                                   prefetch=prefetch)
        grid_spec = pltpu.PrefetchScalarGridSpec(
            num_scalar_prefetch=1,
            grid=(num_tiles,),
            in_specs=[
                pl.BlockSpec(memory_space=pl.ANY),                    # table stays in HBM
            ],
            out_specs=pl.BlockSpec((tile_t, Dp), lambda i, ids_sref: (i, 0)),
            scratch_shapes=[pltpu.SemaphoreType.DMA((prefetch,))],
        )
        out_flat = pl.pallas_call(
            kernel, out_shape=out_shape, grid_spec=grid_spec,
            compiler_params=compiler_params, cost_estimate=cost,
        )(ids, table_p)

    # Strip token / lane padding (skipped when already aligned) and restore (B, S, D).
    out = out_flat
    if T_pad != T:
        out = out[:T]
    if Dp != D:
        out = out[:, :D]
    return out.reshape(B, S, D)


def embedding_reference(x_ids, table, maskable=True):
    emb = jnp.take(table, x_ids, axis=0)
    if maskable:
        keep = (x_ids != 0).at[:, 0].set(True)
        emb = jnp.where(keep[..., None], emb, 0.0)
    return emb


if __name__ == "__main__":
    key = jax.random.PRNGKey(0)
    k_tab, k_ids = jax.random.split(key)

    vocab_size, dim_model = 50, 32
    batch, seq = 2, 8

    # nn.Embedding default init ~ N(0, 1)
    table = jax.random.normal(k_tab, (vocab_size, dim_model), dtype=jnp.float32)
    # token ids with some zeros (padding), including at position 0 to exercise the rule
    x = jax.random.randint(k_ids, (batch, seq), 0, vocab_size, dtype=jnp.int32)
    x = x.at[0, 0].set(0)      # position 0: must still be kept (remolded_x[:, 0] = 1)
    x = x.at[0, 5].set(0)      # padding mid-sequence: must be zeroed
    x = x.at[1, 7].set(0)      # padding at the end: must be zeroed

    ref_masked = embedding_reference(x, table, maskable=True)
    ref_plain = embedding_reference(x, table, maskable=False)

    # Path 1: auto dispatch -> small vocab picks the one-hot MXU path.
    out_auto = jax.block_until_ready(embedding_forward(x, table, maskable=True))
    assert out_auto.shape == (batch, seq, dim_model)
    assert jnp.allclose(out_auto, ref_masked, atol=1e-6), "onehot/auto path mismatch"

    # Path 2: VMEM-resident dynamic-row gather (8-row batched aligned stores).
    out_res = jax.block_until_ready(
        embedding_forward(x, table, maskable=True, mode="resident"))
    assert jnp.allclose(out_res, ref_masked, atol=1e-6), "resident path mismatch"

    # Path 3: streaming HBM row-gather, DMAs landing directly in the output block.
    out_str = jax.block_until_ready(
        embedding_forward(x, table, maskable=True, mode="streaming"))
    assert jnp.allclose(out_str, ref_masked, atol=1e-6), "streaming path mismatch"

    # maskable=False (no remapping besides id clamping).
    out_plain = jax.block_until_ready(embedding_forward(x, table, maskable=False))
    assert jnp.allclose(out_plain, ref_plain, atol=1e-6), "maskable=False mismatch"

    print("KERNEL_OK")
</pallas_src>

<mosaic_0001>
module attributes {stable_mosaic.version = 11 : i64} {
  func.func @_embed_onehot_kernel(%arg0: i32, %arg1: memref<16x1xi32, #tpu.memory_space<vmem>>, %arg2: memref<128x128xf32, #tpu.memory_space<vmem>>, %arg3: memref<16x128xf32, #tpu.memory_space<vmem>>) attributes {dimension_semantics = [#tpu.dimension_semantics<parallel>], iteration_bounds = array<i64: 1>, scalar_prefetch = 0 : i64, scratch_operands = 0 : i64, tpu.core_type = #tpu.core_type<tc>, window_params = [{transform_indices = @transform_0, window_bounds = array<i64: 16, 1>}, {pipeline_mode = #tpu.pipeline_mode<synchronous>, transform_indices = @transform_1, window_bounds = array<i64: 128, 128>}, {transform_indices = @transform_2, window_bounds = array<i64: 16, 128>}]} {
    %c0 = arith.constant 0 : index
    %c0_0 = arith.constant 0 : index
    %0 = vector.load %arg1[%c0, %c0_0] : memref<16x1xi32, #tpu.memory_space<vmem>>, vector<16x1xi32>
    %1 = tpu.iota {dimensions = array<i32: 1>} : vector<16x128xi32>
    %2 = vector.broadcast %0 : vector<16x1xi32> to vector<16x128xi32>
    %3 = arith.cmpi eq, %1, %2 : vector<16x128xi32>
    %4 = arith.extui %3 : vector<16x128xi1> to vector<16x128xi32>
    %5 = arith.sitofp %4 : vector<16x128xi32> to vector<16x128xf32>
    %c0_1 = arith.constant 0 : index
    %c0_2 = arith.constant 0 : index
    %6 = vector.load %arg2[%c0_1, %c0_2] : memref<128x128xf32, #tpu.memory_space<vmem>>, vector<128x128xf32>
    %cst = arith.constant dense<0.000000e+00> : vector<16x128xf32>
    %7 = tpu.matmul %5, %6, %cst {dimension_numbers = #tpu.dot_dimension_numbers<[1], [0], [0], [1], [0, 0, 1, 1], [], []>} : vector<16x128xf32>, vector<128x128xf32>, vector<16x128xf32> -> vector<16x128xf32>
    %c0_3 = arith.constant 0 : index
    %c0_4 = arith.constant 0 : index
    %8 = vector.load %arg3[%c0_3, %c0_4] : memref<16x128xf32, #tpu.memory_space<vmem>>, vector<16x128xf32>
    tpu.vector_store %arg3[%c0_3, %c0_4], %7 {strides = array<i32>} : memref<16x128xf32, #tpu.memory_space<vmem>>, vector<16x128xf32>,
    return
  }
  func.func @transform_0(%arg0: i32) -> (i32, i32) {
    %c0_i32 = arith.constant 0 : i32
    %c0_i32_0 = arith.constant 0 : i32
    return %arg0, %c0_i32 : i32, i32
  }
  func.func @transform_1(%arg0: i32) -> (i32, i32) {
    %c0_i32 = arith.constant 0 : i32
    %c0_i32_0 = arith.constant 0 : i32
    %c0_i32_1 = arith.constant 0 : i32
    return %c0_i32, %c0_i32_0 : i32, i32
  }
  func.func @transform_2(%arg0: i32) -> (i32, i32) {
    %c0_i32 = arith.constant 0 : i32
    %c0_i32_0 = arith.constant 0 : i32
    return %arg0, %c0_i32 : i32, i32
  }
}

</mosaic_0001>

<llo_original>
// kernel: tpu_custom_call.1
$region0: #{tpu_custom_call.1}
  #allocation0 [shape = 'u32[]', space=smem, size = 0x4, offset = 0x4, fixed_abs, tag = 'smem constant byte address 0x4 - core index']
  #allocation1 [shape = 'u32[144,128]{1,0:T(1,128)}', space=vmem, size = 0x12000, scoped, tag = 'internal scratch']
  %s0 = inlined_call_operand.vmem [shape: s32[16,1], index: 0, kind: input, shape index: {}]
  %s1 = inlined_call_operand.hbm [shape: f32[128,128], index: 1, kind: input, shape index: {}]
  %s2 = inlined_call_operand.hbm [shape: f32[16,128], index: 2, kind: output, shape index: {}]
  %s3 = sld [smem:[#allocation0]]
  $region22: #{tpu_custom_call.1} parent=0
    _
  %s5 = ssub.s32 1, %s3
  %s6 = scalar_select 0, %s5, %s3
  $region1: #{tpu_custom_call.1} parent=0
    #allocation2 [shape = 'u8[65536]{0}', space=vmem, size = 0x10000, scoped, tag = 'input window, operand 1, single buffered']
    #allocation3 [shape = 's32[1]{0}', space=sflag, size = 0x4, scoped, tag = 'scoped memory for tpu_custom_call.1']
    #allocation4 [shape = 's32[1]{0}', space=sflag, size = 0x4, scoped, tag = 'scoped memory for tpu_custom_call.1']
    #allocation5 [shape = 'u8[8192]{0}', space=vmem, size = 0x2000, scoped, tag = 'output window, operand 0, single buffered']
    %7 = vsyncpa [#allocation3], 0
    %8 = vsyncpa [#allocation4], 0
    // Predicated region
    $region2: #{tpu_custom_call.1} parent=1 // pred_check
      _
    $region3: #{tpu_custom_call.1} parent=1 // pred_check_branch
      %10 = sbr.rel (0) target = $region5
    $region4: #{tpu_custom_call.1} parent=1 // pred_region
      _
    $region5: #{tpu_custom_call.1} parent=1 // pred_fallthru
      _
    // Predicated region
    $region6: #{tpu_custom_call.1} parent=1 // pred_check
      _
    $region7: #{tpu_custom_call.1} parent=1 // pred_check_branch
      %12 = sbr.rel (0) target = $region9
    $region8: #{tpu_custom_call.1} parent=1 // pred_region
      %s14 = ssub.s32 2048, 2048
      %15 = vsyncadd [#allocation3], %s14
      %s16 = sshll.u32 [#allocation2], 4
      %s17 = int_to_ptr.vmem [resolvable:$true] %s16
      %22 = dma.hbm_to_vmem [thread:$0]  %s1, 2048, %s17, [#allocation3], 128, 128, 8
    $region9: #{tpu_custom_call.1} parent=1 // pred_fallthru
      _
    // Predicated region
    $region10: #{tpu_custom_call.1} parent=1 // pred_check
      _
    $region11: #{tpu_custom_call.1} parent=1 // pred_check_branch
      %24 = sbr.rel (0) target = $region13
    $region12: #{tpu_custom_call.1} parent=1 // pred_region
      %25 = dma.done [#allocation3], 2048
    $region13: #{tpu_custom_call.1} parent=1 // pred_fallthru
      _
    %v26 = vld [vmem:[%s0] sm:$0xff]
    %v27 = vld [vmem:[%s0 + $0x8] sm:$0xff]
    %v28 = vlaneseq
    %v29 = vand.u32 %v28, 127
    %30 = vset.pattern.permute.xlu0 0
    %31 = vperm.xlu0 %30, %v26
    %v32 = vpop.permute.xlu0 %31
    %33 = vset.pattern.permute.xlu0 0
    %34 = vperm.xlu0 %33, %v27
    %v35 = vpop.permute.xlu0 %34
    %vm36 = vcmp.eq.s32.totalorder %v29, %v32
    %vm37 = vcmp.eq.s32.totalorder %v29, %v35
    %v38 = vsel %vm36, 1, 0
    %v39 = vsel %vm37, 1, 0
    %v40 = vcvt.s32.f32 %v38
    %v41 = vcvt.s32.f32 %v39
    %v42 = vld [vmem:[#allocation2] sm:$0xff]
    %v43 = vld [vmem:[#allocation2 + $0x8] sm:$0xff]
    %v44 = vld [vmem:[#allocation2 + $0x10] sm:$0xff]
    %v45 = vld [vmem:[#allocation2 + $0x18] sm:$0xff]
    %v46 = vld [vmem:[#allocation2 + $0x20] sm:$0xff]
    %v47 = vld [vmem:[#allocation2 + $0x28] sm:$0xff]
    %v48 = vld [vmem:[#allocation2 + $0x30] sm:$0xff]
    %v49 = vld [vmem:[#allocation2 + $0x38] sm:$0xff]
    %v50 = vld [vmem:[#allocation2 + $0x40] sm:$0xff]
    %v51 = vld [vmem:[#allocation2 + $0x48] sm:$0xff]
    %v52 = vld [vmem:[#allocation2 + $0x50] sm:$0xff]
    %v53 = vld [vmem:[#allocation2 + $0x58] sm:$0xff]
    %v54 = vld [vmem:[#allocation2 + $0x60] sm:$0xff]
    %v55 = vld [vmem:[#allocation2 + $0x68] sm:$0xff]
    %v56 = vld [vmem:[#allocation2 + $0x70] sm:$0xff]
    %v57 = vld [vmem:[#allocation2 + $0x78] sm:$0xff]
    %58 = vmatprep.subr.mxu0 0.0
    %59 = vmatpush1.msra.mxu0 %v42
    %60 = vmatprep.subr.mxu0 0.0
    %61 = vmatpush1.msra.mxu0 %v43
    %62 = vmatprep.subr.mxu0 0.0
    %63 = vmatpush1.msra.mxu0 %v44
    %64 = vmatprep.subr.mxu0 0.0
    %65 = vmatpush1.msra.mxu0 %v45
    %66 = vmatprep.subr.mxu0 0.0
    %67 = vmatpush1.msra.mxu0 %v46
    %68 = vmatprep.subr.mxu0 0.0
    %69 = vmatpush1.msra.mxu0 %v47
    %70 = vmatprep.subr.mxu0 0.0
    %71 = vmatpush1.msra.mxu0 %v48
    %72 = vmatprep.subr.mxu0 0.0
    %73 = vmatpush1.msra.mxu0 %v49
    %74 = vmatprep.subr.mxu0 0.0
    %75 = vmatpush1.msra.mxu0 %v50
    %76 = vmatprep.subr.mxu0 0.0
    %77 = vmatpush1.msra.mxu0 %v51
    %78 = vmatprep.subr.mxu0 0.0
    %79 = vmatpush1.msra.mxu0 %v52
    %80 = vmatprep.subr.mxu0 0.0
    %81 = vmatpush1.msra.mxu0 %v53
    %82 = vmatprep.subr.mxu0 0.0
    %83 = vmatpush1.msra.mxu0 %v54
    %84 = vmatprep.subr.mxu0 0.0
    %85 = vmatpush1.msra.mxu0 %v55
    %86 = vmatprep.subr.mxu0 0.0
    %87 = vmatpush1.msra.mxu0 %v56
    %88 = vmatprep.subr.mxu0 0.0
    %89 = vmatpush1.msra.mxu0 %v57
    %90 = vmatprep.subr.mxu0 0.0
    %91 = vmatpush1.msra.mxu0 0.0
    %92 = vmatprep.subr.mxu0 0.0
    %93 = vmatpush1.msra.mxu0 0.0
    %94 = vmatprep.subr.mxu0 0.0
    %95 = vmatpush1.msra.mxu0 0.0
    %96 = vmatprep.subr.mxu0 0.0
    %97 = vmatpush1.msra.mxu0 0.0
    %98 = vmatprep.subr.mxu0 0.0
    %99 = vmatpush1.msra.mxu0 0.0
    %100 = vmatprep.subr.mxu0 0.0
    %101 = vmatpush1.msra.mxu0 0.0
    %102 = vmatprep.subr.mxu0 0.0
    %103 = vmatpush1.msra.mxu0 0.0
    %104 = vmatprep.subr.mxu0 0.0
    %105 = vmatpush1.msra.mxu0 0.0
    %106 = vmatprep.subr.mxu0 0.0
    %107 = vmatpush1.msra.mxu0 0.0
    %108 = vmatprep.subr.mxu0 0.0
    %109 = vmatpush1.msra.mxu0 0.0
    %110 = vmatprep.subr.mxu0 0.0
    %111 = vmatpush1.msra.mxu0 0.0
    %112 = vmatprep.subr.mxu0 0.0
    %113 = vmatpush1.msra.mxu0 0.0
    %114 = vmatprep.subr.mxu0 0.0
    %115 = vmatpush1.msra.mxu0 0.0
    %116 = vmatprep.subr.mxu0 0.0
    %117 = vmatpush1.msra.mxu0 0.0
    %118 = vmatprep.subr.mxu0 0.0
    %119 = vmatpush1.msra.mxu0 0.0
    %120 = vmatprep.subr.mxu0 0.0
    %121 = vmatpush1.msra.mxu0 0.0
    %122 = vmatprep.mubr.f32.mxu0 0.0
    %123 = vmatmul.mubr.f32.gmra.mrb[0].mxu0 %v40
    %v124 = vpop.f32.mrb[0].mxu0
    %v125 = vadd.f32 0.0, %v124
    %v126 = vpop.f32.mrb[0].mxu0
    %127 = vmatprep.mubr.f32.mxu0 0.0
    %128 = vmatmul.mubr.f32.gmra.mrb[0].mxu0 %v41
    %v129 = vpop.f32.mrb[0].mxu0
    %v130 = vadd.f32 0.0, %v129
    %v131 = vpop.f32.mrb[0].mxu0
    %132 = vdwg.mxu0
    %133 = vst [vmem:[#allocation5] sm:$0xff] %v125
    %134 = vst [vmem:[#allocation5 + $0x8] sm:$0xff] %v130
    // Predicated region
    $region14: #{tpu_custom_call.1} parent=1 // pred_check
      _
    $region15: #{tpu_custom_call.1} parent=1 // pred_check_branch
      %136 = sbr.rel (0) target = $region17
    $region16: #{tpu_custom_call.1} parent=1 // pred_region
      %s138 = ssub.s32 256, 256
      %139 = vsyncadd [#allocation4], %s138
      %s140 = sshll.u32 [#allocation5], 4
      %s141 = int_to_ptr.vmem [resolvable:$true] %s140
      %146 = dma.vmem_to_hbm [thread:$0]  %s141, 256, %s2, [#allocation4], 128, 128, 8
    $region17: #{tpu_custom_call.1} parent=1 // pred_fallthru
      _
    // Predicated region
    $region18: #{tpu_custom_call.1} parent=1 // pred_check
      _
    $region19: #{tpu_custom_call.1} parent=1 // pred_check_branch
      %148 = sbr.rel (0) target = $region21
    $region20: #{tpu_custom_call.1} parent=1 // pred_region
      %149 = dma.done [#allocation4], 256
    $region21: #{tpu_custom_call.1} parent=1 // pred_fallthru
      _
    %150 = vsyncpa [#allocation3], 1
    %151 = vsyncpa [#allocation4], 1

</llo_original>
